<compile_context>
chip_gen: v5e
topology: v5e:2x2
jax: 0.10.0
libtpu: 0.0.40
codegen_flags: <defaults>
</compile_context>

<pallas_src>
import functools

import jax
import jax.numpy as jnp
from jax.experimental import pallas as pl
from jax.experimental.pallas import tpu as pltpu

_HEAD_PAD = 128  # lane-dense head width (columns 0/1 are real, rest padding)


def _round_up(n, m):
    return ((n + m - 1) // m) * m


def _pad2d(a, rows, cols):
    return jnp.pad(a, ((0, rows - a.shape[0]), (0, cols - a.shape[1])))


def _act(name, x):
    if name == "sigmoid":
        return jax.nn.sigmoid(x)
    if name == "relu":
        return jnp.maximum(x, 0.0)
    if name == "leakyrelu":
        return jnp.where(x >= 0.0, x, 0.01 * x)  # PyTorch default slope 0.01
    if name == "tanh":
        return jnp.tanh(x)
    raise ValueError(name)


def _heads(z):
    # Column 0 -> sigmoid(z)*3 (a), column 1 -> tanh(z)*3 (b).  The remaining
    # 126 columns are zero-weight padding (kept so the store is a full-width
    # (TB, 128) unmasked vst); they are sliced off in the wrapper.
    col = jax.lax.broadcasted_iota(jnp.int32, z.shape, 1)
    return jnp.where(col == 0, jax.nn.sigmoid(z) * 3.0, jnp.tanh(z) * 3.0)


def _itemnet_kernel_d1(x_ref, w1_ref, b1_ref, wab_ref, bab_ref, ab_ref,
                       *, activation):
    # hidden = act(x @ W1 + b1): bf16 MXU matmul with f32 accumulation.
    h = jnp.dot(x_ref[...], w1_ref[...],
                preferred_element_type=jnp.float32) + b1_ref[...]
    h = _act(activation, h).astype(wab_ref.dtype)
    # Fused heads: z = h @ [Wa | Wb | 0...] + [ba | bb | 0...]  -> (TB, 128)
    z = jnp.dot(h, wab_ref[...],
                preferred_element_type=jnp.float32) + bab_ref[...]
    ab_ref[...] = _heads(z).astype(ab_ref.dtype)


def _itemnet_kernel_d3(x_ref, w1_ref, b1_ref, w2_ref, b2_ref, w3_ref, b3_ref,
                       wab_ref, bab_ref, ab_ref, *, activation):
    h = jnp.dot(x_ref[...], w1_ref[...],
                preferred_element_type=jnp.float32) + b1_ref[...]
    h = _act(activation, h).astype(w2_ref.dtype)
    h = jnp.dot(h, w2_ref[...],
                preferred_element_type=jnp.float32) + b2_ref[...]
    h = _act(activation, h).astype(w3_ref.dtype)
    h = jnp.dot(h, w3_ref[...],
                preferred_element_type=jnp.float32) + b3_ref[...]
    h = _act(activation, h).astype(wab_ref.dtype)
    z = jnp.dot(h, wab_ref[...],
                preferred_element_type=jnp.float32) + bab_ref[...]
    ab_ref[...] = _heads(z).astype(ab_ref.dtype)


def itemnet_forward(kparams, x, *, depth=1, activation="sigmoid", tile_b=128):
    """Pallas forward. Returns (a, b), each (batch, 1) float32."""
    B, U = x.shape
    U_pad, H_pad = kparams["w1"].shape

    # Batch tile: multiple of 16 (bf16 sublane packing), capped at tile_b.
    TB = min(int(tile_b), max(16, _round_up(B, 16)))
    B_pad = _round_up(B, TB)

    xp = jnp.pad(x.astype(jnp.bfloat16), ((0, B_pad - B), (0, U_pad - U)))

    if depth == 1:
        weights = (kparams["w1"], kparams["b1"],
                   kparams["wab"], kparams["bab"])
        kernel = functools.partial(_itemnet_kernel_d1, activation=activation)
    elif depth == 3:
        weights = (kparams["w1"], kparams["b1"], kparams["w2"], kparams["b2"],
                   kparams["w3"], kparams["b3"],
                   kparams["wab"], kparams["bab"])
        kernel = functools.partial(_itemnet_kernel_d3, activation=activation)
    else:
        raise ValueError("depth must be 1 or 3")

    # x / out blocks advance with the grid index; weights stay resident.
    def _const_map(i):
        return (0, 0)

    in_specs = [pl.BlockSpec((TB, U_pad), lambda i: (i, 0))]
    in_specs += [pl.BlockSpec(w.shape, _const_map) for w in weights]

    # VMEM budget: resident weights + double-buffered x/out tiles, with
    # headroom, capped below v7x's 64 MiB physical VMEM.
    w_bytes = sum(int(w.size) * w.dtype.itemsize for w in weights)
    tile_bytes = TB * U_pad * 2 + TB * _HEAD_PAD * 4
    est = 2 * (w_bytes + tile_bytes)
    vmem_limit = int(min(max(4 * est, 16 * 2 ** 20), 48 * 2 ** 20))

    # TODO(synk): if num_users grows very large (w1 no longer VMEM-resident),
    # add a K-reduction grid axis (last, "arbitrary") with a VMEM f32
    # accumulator instead of loading the whole (U_pad, H_pad) w1 at once.
    ab = pl.pallas_call(
        kernel,
        out_shape=jax.ShapeDtypeStruct((B_pad, _HEAD_PAD), jnp.float32),
        grid=(pl.cdiv(B_pad, TB),),
        in_specs=in_specs,
        out_specs=pl.BlockSpec((TB, _HEAD_PAD), lambda i: (i, 0)),
        compiler_params=pltpu.CompilerParams(
            dimension_semantics=("parallel",),
            vmem_limit_bytes=vmem_limit),
    )(xp, *weights)

    a = ab[:B, 0:1]
    b = ab[:B, 1:2]
    return a, b


def init_params(key, num_users, hidden_dim, depth=1):
    """Unpadded f32 params mimicking nn.Linear init (U(-1/sqrt(fan_in), ...))."""
    def linear(k, fan_in, fan_out):
        kw, kb = jax.random.split(k)
        bound = 1.0 / jnp.sqrt(jnp.float32(fan_in))
        w = jax.random.uniform(kw, (fan_in, fan_out), jnp.float32, -bound, bound)
        b = jax.random.uniform(kb, (1, fan_out), jnp.float32, -bound, bound)
        return w, b

    keys = jax.random.split(key, 5)
    params = {}
    params["w1"], params["b1"] = linear(keys[0], num_users, hidden_dim)
    if depth == 3:
        params["w2"], params["b2"] = linear(keys[1], hidden_dim, hidden_dim * 2)
        params["w3"], params["b3"] = linear(keys[2], hidden_dim * 2, hidden_dim)
    # Fuse linear_a and linear_b into one (H, 2) weight / (1, 2) bias.
    wa, ba = linear(keys[3], hidden_dim, 1)
    wb, bb = linear(keys[4], hidden_dim, 1)
    params["wab"] = jnp.concatenate([wa, wb], axis=1)
    params["bab"] = jnp.concatenate([ba, bb], axis=1)
    return params


def prepare_kernel_params(params, depth=1):
    """Zero-pad to MXU/lane-aligned shapes and cast weights to bf16.

    Padded hidden columns produce act(0) values, but every downstream weight
    row that consumes them is zero-padded, so the real outputs are unchanged.
    """
    U, H = params["w1"].shape
    U_pad = _round_up(U, 128)
    H_pad = _round_up(H, 128)
    kp = {
        "w1": _pad2d(params["w1"], U_pad, H_pad).astype(jnp.bfloat16),
        "b1": _pad2d(params["b1"], 1, H_pad).astype(jnp.float32),
        "wab": _pad2d(params["wab"], H_pad, _HEAD_PAD).astype(jnp.bfloat16),
        "bab": _pad2d(params["bab"], 1, _HEAD_PAD).astype(jnp.float32),
    }
    if depth == 3:
        H2 = params["w2"].shape[1]
        H2_pad = _round_up(H2, 128)
        kp["w2"] = _pad2d(params["w2"], H_pad, H2_pad).astype(jnp.bfloat16)
        kp["b2"] = _pad2d(params["b2"], 1, H2_pad).astype(jnp.float32)
        kp["w3"] = _pad2d(params["w3"], H2_pad, H_pad).astype(jnp.bfloat16)
        kp["b3"] = _pad2d(params["b3"], 1, H_pad).astype(jnp.float32)
    return kp


def itemnet_reference(params, x, *, depth=1, activation="sigmoid"):
    """Pure-JAX f32 reference matching the PyTorch module."""
    h = _act(activation, x @ params["w1"] + params["b1"])
    if depth == 3:
        h = _act(activation, h @ params["w2"] + params["b2"])
        h = _act(activation, h @ params["w3"] + params["b3"])
    z = h @ params["wab"] + params["bab"]
    a = jax.nn.sigmoid(z[:, 0:1]) * 3.0
    b = jnp.tanh(z[:, 1:2]) * 3.0
    return a, b


if __name__ == "__main__":
    key = jax.random.PRNGKey(0)

    batch = 8
    num_users = 64     # fc1 input features
    hidden_dim = 32    # hidden_dim of the module
    activation = "sigmoid"

    for depth in (1, 3):
        k_param, k_x = jax.random.split(jax.random.fold_in(key, depth))
        params = init_params(k_param, num_users, hidden_dim, depth=depth)
        kparams = prepare_kernel_params(params, depth=depth)
        x = jax.random.normal(k_x, (batch, num_users), jnp.float32)

        a, b = itemnet_forward(kparams, x, depth=depth, activation=activation)
        a = jax.block_until_ready(a)
        b = jax.block_until_ready(b)

        a_ref, b_ref = itemnet_reference(params, x, depth=depth,
                                         activation=activation)
        assert a.shape == (batch, 1) and b.shape == (batch, 1)
        # Loose tolerance: kernel stores x / weights / inter-layer activations
        # in bf16 (the reference is pure f32).
        assert jnp.allclose(a, a_ref, atol=5e-2, rtol=5e-2)
        assert jnp.allclose(b, b_ref, atol=5e-2, rtol=5e-2)

    print("KERNEL_OK")
</pallas_src>

<mosaic_0001>
module attributes {stable_mosaic.version = 11 : i64} {
  func.func @_itemnet_kernel_d1(%arg0: i32, %arg1: memref<16x128xbf16, #tpu.memory_space<vmem>>, %arg2: memref<128x128xbf16, #tpu.memory_space<vmem>>, %arg3: memref<1x128xf32, #tpu.memory_space<vmem>>, %arg4: memref<128x128xbf16, #tpu.memory_space<vmem>>, %arg5: memref<1x128xf32, #tpu.memory_space<vmem>>, %arg6: memref<16x128xf32, #tpu.memory_space<vmem>>) attributes {dimension_semantics = [#tpu.dimension_semantics<parallel>], iteration_bounds = array<i64: 1>, scalar_prefetch = 0 : i64, scratch_operands = 0 : i64, tpu.core_type = #tpu.core_type<tc>, window_params = [{transform_indices = @transform_0, window_bounds = array<i64: 16, 128>}, {pipeline_mode = #tpu.pipeline_mode<synchronous>, transform_indices = @transform_1, window_bounds = array<i64: 128, 128>}, {pipeline_mode = #tpu.pipeline_mode<synchronous>, transform_indices = @transform_2, window_bounds = array<i64: 1, 128>}, {pipeline_mode = #tpu.pipeline_mode<synchronous>, transform_indices = @transform_3, window_bounds = array<i64: 128, 128>}, {pipeline_mode = #tpu.pipeline_mode<synchronous>, transform_indices = @transform_4, window_bounds = array<i64: 1, 128>}, {transform_indices = @transform_5, window_bounds = array<i64: 16, 128>}]} {
    %c0 = arith.constant 0 : index
    %c0_0 = arith.constant 0 : index
    %0 = vector.load %arg1[%c0, %c0_0] : memref<16x128xbf16, #tpu.memory_space<vmem>>, vector<16x128xbf16>
    %c0_1 = arith.constant 0 : index
    %c0_2 = arith.constant 0 : index
    %1 = vector.load %arg2[%c0_1, %c0_2] : memref<128x128xbf16, #tpu.memory_space<vmem>>, vector<128x128xbf16>
    %cst = arith.constant dense<0.000000e+00> : vector<16x128xf32>
    %2 = tpu.matmul %0, %1, %cst {dimension_numbers = #tpu.dot_dimension_numbers<[1], [0], [0], [1], [0, 0, 1, 1], [], []>} : vector<16x128xbf16>, vector<128x128xbf16>, vector<16x128xf32> -> vector<16x128xf32>
    %c0_3 = arith.constant 0 : index
    %c0_4 = arith.constant 0 : index
    %3 = vector.load %arg3[%c0_3, %c0_4] : memref<1x128xf32, #tpu.memory_space<vmem>>, vector<1x128xf32>
    %4 = vector.broadcast %3 : vector<1x128xf32> to vector<16x128xf32>
    %5 = arith.addf %2, %4 : vector<16x128xf32>
    %6 = arith.negf %5 : vector<16x128xf32>
    %7 = math.exp %6 : vector<16x128xf32>
    %cst_5 = arith.constant 1.000000e+00 : f32
    %8 = vector.broadcast %cst_5 : f32 to vector<16x128xf32>
    %9 = arith.addf %8, %7 : vector<16x128xf32>
    %10 = arith.divf %8, %9 : vector<16x128xf32>
    %11 = arith.truncf %10 : vector<16x128xf32> to vector<16x128xbf16>
    %c0_6 = arith.constant 0 : index
    %c0_7 = arith.constant 0 : index
    %12 = vector.load %arg4[%c0_6, %c0_7] : memref<128x128xbf16, #tpu.memory_space<vmem>>, vector<128x128xbf16>
    %cst_8 = arith.constant dense<0.000000e+00> : vector<16x128xf32>
    %13 = tpu.matmul %11, %12, %cst_8 {dimension_numbers = #tpu.dot_dimension_numbers<[1], [0], [0], [1], [0, 0, 1, 1], [], []>} : vector<16x128xbf16>, vector<128x128xbf16>, vector<16x128xf32> -> vector<16x128xf32>
    %c0_9 = arith.constant 0 : index
    %c0_10 = arith.constant 0 : index
    %14 = vector.load %arg5[%c0_9, %c0_10] : memref<1x128xf32, #tpu.memory_space<vmem>>, vector<1x128xf32>
    %15 = vector.broadcast %14 : vector<1x128xf32> to vector<16x128xf32>
    %16 = arith.addf %13, %15 : vector<16x128xf32>
    %17 = tpu.iota {dimensions = array<i32: 1>} : vector<16x128xi32>
    %c0_i32 = arith.constant 0 : i32
    %18 = vector.broadcast %c0_i32 : i32 to vector<16x128xi32>
    %19 = arith.cmpi eq, %17, %18 : vector<16x128xi32>
    %20 = arith.negf %16 : vector<16x128xf32>
    %21 = math.exp %20 : vector<16x128xf32>
    %cst_11 = arith.constant 1.000000e+00 : f32
    %22 = vector.broadcast %cst_11 : f32 to vector<16x128xf32>
    %23 = arith.addf %22, %21 : vector<16x128xf32>
    %24 = arith.divf %22, %23 : vector<16x128xf32>
    %cst_12 = arith.constant 3.000000e+00 : f32
    %25 = vector.broadcast %cst_12 : f32 to vector<16x128xf32>
    %26 = arith.mulf %24, %25 : vector<16x128xf32>
    %27 = math.tanh %16 : vector<16x128xf32>
    %cst_13 = arith.constant 3.000000e+00 : f32
    %28 = vector.broadcast %cst_13 : f32 to vector<16x128xf32>
    %29 = arith.mulf %27, %28 : vector<16x128xf32>
    %30 = arith.select %19, %26, %29 : vector<16x128xi1>, vector<16x128xf32>
    %c0_14 = arith.constant 0 : index
    %c0_15 = arith.constant 0 : index
    %31 = vector.load %arg6[%c0_14, %c0_15] : memref<16x128xf32, #tpu.memory_space<vmem>>, vector<16x128xf32>
    tpu.vector_store %arg6[%c0_14, %c0_15], %30 {strides = array<i32>} : memref<16x128xf32, #tpu.memory_space<vmem>>, vector<16x128xf32>,
    return
  }
  func.func @transform_0(%arg0: i32) -> (i32, i32) {
    %c0_i32 = arith.constant 0 : i32
    %c0_i32_0 = arith.constant 0 : i32
    return %arg0, %c0_i32 : i32, i32
  }
  func.func @transform_1(%arg0: i32) -> (i32, i32) {
    %c0_i32 = arith.constant 0 : i32
    %c0_i32_0 = arith.constant 0 : i32
    %c0_i32_1 = arith.constant 0 : i32
    return %c0_i32, %c0_i32_0 : i32, i32
  }
  func.func @transform_2(%arg0: i32) -> (i32, i32) {
    %c0_i32 = arith.constant 0 : i32
    %c0_i32_0 = arith.constant 0 : i32
    %c0_i32_1 = arith.constant 0 : i32
    return %c0_i32, %c0_i32_0 : i32, i32
  }
  func.func @transform_3(%arg0: i32) -> (i32, i32) {
    %c0_i32 = arith.constant 0 : i32
    %c0_i32_0 = arith.constant 0 : i32
    %c0_i32_1 = arith.constant 0 : i32
    return %c0_i32, %c0_i32_0 : i32, i32
  }
  func.func @transform_4(%arg0: i32) -> (i32, i32) {
    %c0_i32 = arith.constant 0 : i32
    %c0_i32_0 = arith.constant 0 : i32
    %c0_i32_1 = arith.constant 0 : i32
    return %c0_i32, %c0_i32_0 : i32, i32
  }
  func.func @transform_5(%arg0: i32) -> (i32, i32) {
    %c0_i32 = arith.constant 0 : i32
    %c0_i32_0 = arith.constant 0 : i32
    return %arg0, %c0_i32 : i32, i32
  }
}

</mosaic_0001>

<llo_original>
// kernel: tpu_custom_call.1
$region0: #{tpu_custom_call.1}
  #allocation0 [shape = 'u32[]', space=smem, size = 0x4, offset = 0x4, fixed_abs, tag = 'smem constant byte address 0x4 - core index']
  #allocation1 [shape = 'u32[72,128]{1,0:T(1,128)}', space=vmem, size = 0x9000, scoped, tag = 'internal scratch']
  %s0 = inlined_call_operand.hbm [shape: bf16[16,128], index: 0, kind: input, shape index: {}]
  %s1 = inlined_call_operand.hbm [shape: bf16[128,128], index: 1, kind: input, shape index: {}]
  %s2 = inlined_call_operand.vmem [shape: f32[1,128], index: 2, kind: input, shape index: {}]
  %s3 = inlined_call_operand.hbm [shape: bf16[128,128], index: 3, kind: input, shape index: {}]
  %s4 = inlined_call_operand.vmem [shape: f32[1,128], index: 4, kind: input, shape index: {}]
  %s5 = inlined_call_operand.hbm [shape: f32[16,128], index: 5, kind: output, shape index: {}]
  %s6 = sld [smem:[#allocation0]]
  $region42: #{tpu_custom_call.1} parent=0
    _
  %s8 = ssub.s32 1, %s6
  %s9 = scalar_select 0, %s8, %s6
  $region1: #{tpu_custom_call.1} parent=0
    #allocation2 [shape = 'u8[4096]{0}', space=vmem, size = 0x1000, scoped, tag = 'input window, operand 0, single buffered']
    #allocation3 [shape = 's32[1]{0}', space=sflag, size = 0x4, scoped, tag = 'scoped memory for tpu_custom_call.1']
    #allocation4 [shape = 's32[1]{0}', space=sflag, size = 0x4, scoped, tag = 'scoped memory for tpu_custom_call.1']
    #allocation5 [shape = 'u8[32768]{0}', space=vmem, size = 0x8000, scoped, tag = 'input window, operand 1, single buffered']
    #allocation6 [shape = 's32[1]{0}', space=sflag, size = 0x4, scoped, tag = 'scoped memory for tpu_custom_call.1']
    #allocation7 [shape = 'u8[32768]{0}', space=vmem, size = 0x8000, scoped, tag = 'input window, operand 3, single buffered']
    #allocation8 [shape = 'u8[8192]{0}', space=vmem, size = 0x2000, scoped, tag = 'output window, operand 0, single buffered']
    %10 = vsyncpa [#allocation3], 0
    %11 = vsyncpa [#allocation6], 0
    %12 = vsyncpa [#allocation4], 0
    // Predicated region
    $region2: #{tpu_custom_call.1} parent=1 // pred_check
      _
    $region3: #{tpu_custom_call.1} parent=1 // pred_check_branch
      %14 = sbr.rel (0) target = $region5
    $region4: #{tpu_custom_call.1} parent=1 // pred_region
      %16 = vsyncadd [#allocation3], 0
      %s17 = sshll.u32 %s0, 4
      %s18 = int_to_ptr.hbm [resolvable:$true] %s17
      %s19 = sshll.u32 [#allocation2], 4
      %s20 = int_to_ptr.vmem [resolvable:$true] %s19
      %25 = dma.hbm_to_vmem [thread:$0]  %s18, 128, %s20, [#allocation3], 64, 64, 4
    $region5: #{tpu_custom_call.1} parent=1 // pred_fallthru
      _
    // Predicated region
    $region6: #{tpu_custom_call.1} parent=1 // pred_check
      _
    $region7: #{tpu_custom_call.1} parent=1 // pred_check_branch
      %27 = sbr.rel (0) target = $region9
    $region8: #{tpu_custom_call.1} parent=1 // pred_region
      %29 = vsyncadd [#allocation6], 0
      %s30 = sshll.u32 %s1, 4
      %s31 = int_to_ptr.hbm [resolvable:$true] %s30
      %s32 = sshll.u32 [#allocation5], 4
      %s33 = int_to_ptr.vmem [resolvable:$true] %s32
      %38 = dma.hbm_to_vmem [thread:$0]  %s31, 1024, %s33, [#allocation6], 64, 64, 4
    $region9: #{tpu_custom_call.1} parent=1 // pred_fallthru
      _
    // Predicated region
    $region10: #{tpu_custom_call.1} parent=1 // pred_check
      _
    $region11: #{tpu_custom_call.1} parent=1 // pred_check_branch
      %40 = sbr.rel (0) target = $region13
    $region12: #{tpu_custom_call.1} parent=1 // pred_region
      _
    $region13: #{tpu_custom_call.1} parent=1 // pred_fallthru
      _
    // Predicated region
    $region14: #{tpu_custom_call.1} parent=1 // pred_check
      _
    $region15: #{tpu_custom_call.1} parent=1 // pred_check_branch
      %42 = sbr.rel (0) target = $region17
    $region16: #{tpu_custom_call.1} parent=1 // pred_region
      %44 = vsyncadd [#allocation6], 0
      %s45 = sshll.u32 %s3, 4
      %s46 = int_to_ptr.hbm [resolvable:$true] %s45
      %s47 = sshll.u32 [#allocation7], 4
      %s48 = int_to_ptr.vmem [resolvable:$true] %s47
      %53 = dma.hbm_to_vmem [thread:$0]  %s46, 1024, %s48, [#allocation6], 64, 64, 4
    $region17: #{tpu_custom_call.1} parent=1 // pred_fallthru
      _
    // Predicated region
    $region18: #{tpu_custom_call.1} parent=1 // pred_check
      _
    $region19: #{tpu_custom_call.1} parent=1 // pred_check_branch
      %55 = sbr.rel (0) target = $region21
    $region20: #{tpu_custom_call.1} parent=1 // pred_region
      _
    $region21: #{tpu_custom_call.1} parent=1 // pred_fallthru
      _
    // Predicated region
    $region22: #{tpu_custom_call.1} parent=1 // pred_check
      _
    $region23: #{tpu_custom_call.1} parent=1 // pred_check_branch
      %57 = sbr.rel (0) target = $region25
    $region24: #{tpu_custom_call.1} parent=1 // pred_region
      %59 = dma.done [#allocation3], 128
    $region25: #{tpu_custom_call.1} parent=1 // pred_fallthru
      _
    // Predicated region
    $region26: #{tpu_custom_call.1} parent=1 // pred_check
      _
    $region27: #{tpu_custom_call.1} parent=1 // pred_check_branch
      %61 = sbr.rel (0) target = $region29
    $region28: #{tpu_custom_call.1} parent=1 // pred_region
      %63 = dma.done [#allocation6], 1024
    $region29: #{tpu_custom_call.1} parent=1 // pred_fallthru
      _
    // Predicated region
    $region30: #{tpu_custom_call.1} parent=1 // pred_check
      _
    $region31: #{tpu_custom_call.1} parent=1 // pred_check_branch
      %65 = sbr.rel (0) target = $region33
    $region32: #{tpu_custom_call.1} parent=1 // pred_region
      %67 = dma.done [#allocation6], 1024
    $region33: #{tpu_custom_call.1} parent=1 // pred_fallthru
      _
    %v68 = vld [vmem:[#allocation2] sm:$0xf]
    %v69 = vld [vmem:[#allocation2 + $0x4] sm:$0xf]
    %v70 = vld [vmem:[#allocation5] sm:$0xf]
    %v71 = vld [vmem:[#allocation5 + $0x4] sm:$0xf]
    %v72 = vld [vmem:[#allocation5 + $0x8] sm:$0xf]
    %v73 = vld [vmem:[#allocation5 + $0xc] sm:$0xf]
    %v74 = vld [vmem:[#allocation5 + $0x10] sm:$0xf]
    %v75 = vld [vmem:[#allocation5 + $0x14] sm:$0xf]
    %v76 = vld [vmem:[#allocation5 + $0x18] sm:$0xf]
    %v77 = vld [vmem:[#allocation5 + $0x1c] sm:$0xf]
    %v78 = vld [vmem:[#allocation5 + $0x20] sm:$0xf]
    %v79 = vld [vmem:[#allocation5 + $0x24] sm:$0xf]
    %v80 = vld [vmem:[#allocation5 + $0x28] sm:$0xf]
    %v81 = vld [vmem:[#allocation5 + $0x2c] sm:$0xf]
    %v82 = vld [vmem:[#allocation5 + $0x30] sm:$0xf]
    %v83 = vld [vmem:[#allocation5 + $0x34] sm:$0xf]
    %v84 = vld [vmem:[#allocation5 + $0x38] sm:$0xf]
    %v85 = vld [vmem:[#allocation5 + $0x3c] sm:$0xf]
    %v86 = vld [vmem:[%s2] sm:$0x1]
    %v88 = vperm.slane %v86, 0
    %v92 = vunpack.c.l.b16 %v68
    %v93 = vunpack.c.l.b16 %v69
    %v94 = vpack.c.b16 %v93, %v92
    %v112 = vunpack.c.l.b16 %v70
    %v113 = vunpack.c.l.b16 %v71
    %v114 = vunpack.c.l.b16 %v72
    %v115 = vunpack.c.l.b16 %v73
    %v116 = vunpack.c.l.b16 %v74
    %v117 = vunpack.c.l.b16 %v75
    %v118 = vunpack.c.l.b16 %v76
    %v119 = vunpack.c.l.b16 %v77
    %v120 = vunpack.c.l.b16 %v78
    %v121 = vunpack.c.l.b16 %v79
    %v122 = vunpack.c.l.b16 %v80
    %v123 = vunpack.c.l.b16 %v81
    %v124 = vunpack.c.l.b16 %v82
    %v125 = vunpack.c.l.b16 %v83
    %v126 = vunpack.c.l.b16 %v84
    %v127 = vunpack.c.l.b16 %v85
    %v128 = vpack.c.b16 %v113, %v112
    %v129 = vpack.c.b16 %v115, %v114
    %v130 = vpack.c.b16 %v117, %v116
    %v131 = vpack.c.b16 %v119, %v118
    %v132 = vpack.c.b16 %v121, %v120
    %v133 = vpack.c.b16 %v123, %v122
    %v134 = vpack.c.b16 %v125, %v124
    %v135 = vpack.c.b16 %v127, %v126
    %144 = vmatpush.bf16.msra.mxu0 %v135
    %145 = vmatpush.bf16.msra.mxu0 %v134
    %146 = vmatpush.bf16.msra.mxu0 %v133
    %147 = vmatpush.bf16.msra.mxu0 %v132
    %148 = vmatpush.bf16.msra.mxu0 %v131
    %149 = vmatpush.bf16.msra.mxu0 %v130
    %150 = vmatpush.bf16.msra.mxu0 %v129
    %151 = vmatpush.bf16.msra.mxu0 %v128
    %152 = vmatmul.bf16.gmra.mxu0 %v94
    %v153 = vpop.f32.mrf.mxu0
    %v154 = vadd.f32 %v88, %v153
    %v155 = vpop.f32.mrf.mxu0
    %v156 = vadd.f32 %v88, %v155
    %157 = vdwg.mxu0
    %v158 = vxor.u32 %v154, 2147483648
    %v159 = vxor.u32 %v156, 2147483648
    %v160 = vmul.f32 %v158, 1.442695
    %v161 = vpow.pop %v160
    %v162 = vmul.f32 %v159, 1.442695
    %v163 = vpow.pop %v162
    %v164 = vadd.f32 %v161, 1.0
    %v165 = vadd.f32 %v163, 1.0
    %v166 = vrcp.pop %v164
    %v167 = vmul.f32 %v164, %v166
    %v168 = vsub.f32 1.0, %v167
    %v169 = vmul.f32 %v166, %v168
    %v170 = vadd.f32 %v166, %v169
    %vm171 = vweird.f32 %v164
    %vm172 = vweird.f32 %v166
    %vm173 = vmor %vm171, %vm172
    %v174 = vsel %vm173, %v166, %v170
    %v175 = vand.u32 2147483647, %v164
    %vm176 = vcmp.eq.f32.partialorder %v175, 8.507059e+37
    %v177 = vand.u32 %v164, 2147483648
    %v178 = vor.u32 1.1754944e-38, %v177
    %v179 = vsel %vm176, %v178, %v174
    %v180 = vmul.f32 1.0, %v179
    %v181 = vrcp.pop %v165
    %v182 = vmul.f32 %v165, %v181
    %v183 = vsub.f32 1.0, %v182
    %v184 = vmul.f32 %v181, %v183
    %v185 = vadd.f32 %v181, %v184
    %vm186 = vweird.f32 %v165
    %vm187 = vweird.f32 %v181
    %vm188 = vmor %vm186, %vm187
    %v189 = vsel %vm188, %v181, %v185
    %v190 = vand.u32 2147483647, %v165
    %vm191 = vcmp.eq.f32.partialorder %v190, 8.507059e+37
    %v192 = vand.u32 %v165, 2147483648
    %v193 = vor.u32 1.1754944e-38, %v192
    %v194 = vsel %vm191, %v193, %v189
    %v195 = vmul.f32 1.0, %v194
    %v196 = vpack.c.bf16 %v195, %v180
    %v197 = vld [vmem:[#allocation7] sm:$0xf]
    %v198 = vld [vmem:[#allocation7 + $0x4] sm:$0xf]
    %v199 = vld [vmem:[#allocation7 + $0x8] sm:$0xf]
    %v200 = vld [vmem:[#allocation7 + $0xc] sm:$0xf]
    %v201 = vld [vmem:[#allocation7 + $0x10] sm:$0xf]
    %v202 = vld [vmem:[#allocation7 + $0x14] sm:$0xf]
    %v203 = vld [vmem:[#allocation7 + $0x18] sm:$0xf]
    %v204 = vld [vmem:[#allocation7 + $0x1c] sm:$0xf]
    %v205 = vld [vmem:[#allocation7 + $0x20] sm:$0xf]
    %v206 = vld [vmem:[#allocation7 + $0x24] sm:$0xf]
    %v207 = vld [vmem:[#allocation7 + $0x28] sm:$0xf]
    %v208 = vld [vmem:[#allocation7 + $0x2c] sm:$0xf]
    %v209 = vld [vmem:[#allocation7 + $0x30] sm:$0xf]
    %v210 = vld [vmem:[#allocation7 + $0x34] sm:$0xf]
    %v211 = vld [vmem:[#allocation7 + $0x38] sm:$0xf]
    %v212 = vld [vmem:[#allocation7 + $0x3c] sm:$0xf]
    %v213 = vld [vmem:[%s4] sm:$0x1]
    %v215 = vperm.slane %v213, 0
    %v233 = vunpack.c.l.b16 %v197
    %v234 = vunpack.c.l.b16 %v198
    %v235 = vunpack.c.l.b16 %v199
    %v236 = vunpack.c.l.b16 %v200
    %v237 = vunpack.c.l.b16 %v201
    %v238 = vunpack.c.l.b16 %v202
    %v239 = vunpack.c.l.b16 %v203
    %v240 = vunpack.c.l.b16 %v204
    %v241 = vunpack.c.l.b16 %v205
    %v242 = vunpack.c.l.b16 %v206
    %v243 = vunpack.c.l.b16 %v207
    %v244 = vunpack.c.l.b16 %v208
    %v245 = vunpack.c.l.b16 %v209
    %v246 = vunpack.c.l.b16 %v210
    %v247 = vunpack.c.l.b16 %v211
    %v248 = vunpack.c.l.b16 %v212
    %v249 = vpack.c.b16 %v234, %v233
    %v250 = vpack.c.b16 %v236, %v235
    %v251 = vpack.c.b16 %v238, %v237
    %v252 = vpack.c.b16 %v240, %v239
    %v253 = vpack.c.b16 %v242, %v241
    %v254 = vpack.c.b16 %v244, %v243
    %v255 = vpack.c.b16 %v246, %v245
    %v256 = vpack.c.b16 %v248, %v247
    %265 = vmatpush.bf16.msra.mxu0 %v256
    %266 = vmatpush.bf16.msra.mxu0 %v255
    %267 = vmatpush.bf16.msra.mxu0 %v254
    %268 = vmatpush.bf16.msra.mxu0 %v253
    %269 = vmatpush.bf16.msra.mxu0 %v252
    %270 = vmatpush.bf16.msra.mxu0 %v251
    %271 = vmatpush.bf16.msra.mxu0 %v250
    %272 = vmatpush.bf16.msra.mxu0 %v249
    %273 = vmatmul.bf16.gmra.mxu0 %v196
    %v274 = vpop.f32.mrf.mxu0
    %v275 = vadd.f32 %v215, %v274
    %v276 = vpop.f32.mrf.mxu0
    %v277 = vadd.f32 %v215, %v276
    %278 = vdwg.mxu0
    %v279 = vlaneseq
    %v280 = vand.u32 %v279, 127
    %vm281 = vcmp.eq.s32.totalorder %v280, 0
    %v282 = vxor.u32 %v275, 2147483648
    %v283 = vxor.u32 %v277, 2147483648
    %v284 = vmul.f32 %v282, 1.442695
    %v285 = vpow.pop %v284
    %v286 = vmul.f32 %v283, 1.442695
    %v287 = vpow.pop %v286
    %v288 = vadd.f32 %v285, 1.0
    %v289 = vadd.f32 %v287, 1.0
    %v290 = vrcp.pop %v288
    %v291 = vmul.f32 %v288, %v290
    %v292 = vsub.f32 1.0, %v291
    %v293 = vmul.f32 %v290, %v292
    %v294 = vadd.f32 %v290, %v293
    %vm295 = vweird.f32 %v288
    %vm296 = vweird.f32 %v290
    %vm297 = vmor %vm295, %vm296
    %v298 = vsel %vm297, %v290, %v294
    %v299 = vand.u32 2147483647, %v288
    %vm300 = vcmp.eq.f32.partialorder %v299, 8.507059e+37
    %v301 = vand.u32 %v288, 2147483648
    %v302 = vor.u32 1.1754944e-38, %v301
    %v303 = vsel %vm300, %v302, %v298
    %v304 = vmul.f32 1.0, %v303
    %v305 = vrcp.pop %v289
    %v306 = vmul.f32 %v289, %v305
    %v307 = vsub.f32 1.0, %v306
    %v308 = vmul.f32 %v305, %v307
    %v309 = vadd.f32 %v305, %v308
    %vm310 = vweird.f32 %v289
    %vm311 = vweird.f32 %v305
    %vm312 = vmor %vm310, %vm311
    %v313 = vsel %vm312, %v305, %v309
    %v314 = vand.u32 2147483647, %v289
    %vm315 = vcmp.eq.f32.partialorder %v314, 8.507059e+37
    %v316 = vand.u32 %v289, 2147483648
    %v317 = vor.u32 1.1754944e-38, %v316
    %v318 = vsel %vm315, %v317, %v313
    %v319 = vmul.f32 1.0, %v318
    %v320 = vmul.f32 %v304, 3.0
    %v321 = vmul.f32 %v319, 3.0
    %v322 = vtanh.pop %v275
    %v323 = vtanh.pop %v277
    %v324 = vmul.f32 %v322, 3.0
    %v325 = vmul.f32 %v323, 3.0
    %v326 = vsel %vm281, %v320, %v324
    %v327 = vsel %vm281, %v321, %v325
    %328 = vst [vmem:[#allocation8] sm:$0xff] %v326
    %329 = vst [vmem:[#allocation8 + $0x8] sm:$0xff] %v327
    // Predicated region
    $region34: #{tpu_custom_call.1} parent=1 // pred_check
      _
    $region35: #{tpu_custom_call.1} parent=1 // pred_check_branch
      %331 = sbr.rel (0) target = $region37
    $region36: #{tpu_custom_call.1} parent=1 // pred_region
      %333 = vsyncadd [#allocation4], 0
      %s334 = sshll.u32 [#allocation8], 4
      %s335 = int_to_ptr.vmem [resolvable:$true] %s334
      %s336 = sshll.u32 %s5, 4
      %s337 = int_to_ptr.hbm [resolvable:$true] %s336
      %342 = dma.vmem_to_hbm [thread:$0]  %s335, 256, %s337, [#allocation4], 128, 128, 8
    $region37: #{tpu_custom_call.1} parent=1 // pred_fallthru
      _
    // Predicated region
    $region38: #{tpu_custom_call.1} parent=1 // pred_check
      _
    $region39: #{tpu_custom_call.1} parent=1 // pred_check_branch
      %344 = sbr.rel (0) target = $region41
    $region40: #{tpu_custom_call.1} parent=1 // pred_region
      %346 = dma.done [#allocation4], 256
    $region41: #{tpu_custom_call.1} parent=1 // pred_fallthru
      _
    %347 = vsyncpa [#allocation3], 1
    %348 = vsyncpa [#allocation6], 1
    %349 = vsyncpa [#allocation4], 1

</llo_original>
